<compile_context>
chip_gen: v5e
topology: v5e:2x2
jax: 0.10.0
libtpu: 0.0.40
codegen_flags: <defaults>
</compile_context>

<pallas_src>
import functools

import numpy as np
import jax
import jax.numpy as jnp
from jax.experimental import pallas as pl
from jax.experimental.pallas import tpu as pltpu


# ----------------------------- Gaussian helpers -----------------------------

def _gaussian_taps(sigma, kernel_size):
    r = (kernel_size - 1) // 2
    off = np.arange(kernel_size, dtype=np.float64) - r
    g = np.exp(-(off ** 2) / (2.0 * float(sigma) ** 2))
    g = g / g.sum()
    return g.astype(np.float32)


def _conv_matrix(length, taps):
    """Banded Toeplitz matrix K s.t. (x @ K) == zero-padded 'same' 1D conv
    (taps are symmetric so K is symmetric)."""
    r = (len(taps) - 1) // 2
    K = np.zeros((length, length), np.float32)
    for i in range(length):
        for j in range(length):
            t = i - j
            if abs(t) <= r:
                K[i, j] = taps[t + r]
    return K


# --------------------------------- kernel -----------------------------------

def _fused_sinkhorn_kernel(alpha_ref, bases_ref, kw_ref, kdh_ref,
                           bary_ref, vout_ref,
                           dh_scr, state_ref,
                           *, eps, aw, tol):
    """One grid step == one Sinkhorn barycenter iteration.

    State (barycenter, v) lives in the resident output VMEM buffers across the
    whole grid; `state_ref` (SMEM) == 1 once converged or non-finite (freeze).
    """
    N, C, D, H, W = bases_ref.shape
    NC = N * C
    DH = D * H
    i = pl.program_id(0)

    # ---- init state on the first iteration -----------------------------
    @pl.when(i == 0)
    def _init():
        bary_ref[...] = jnp.ones(bary_ref.shape, jnp.float32)
        vout_ref[...] = jnp.ones(vout_ref.shape, jnp.float32)
        state_ref[0] = jnp.int32(0)

    # ---- one Sinkhorn iteration (skipped once done) ---------------------
    @pl.when(state_ref[0] == 0)
    def _update():
        kw = kw_ref[...]          # (W, W)   symmetric Toeplitz (W-axis conv)
        kdh = kdh_ref[...]        # (DH, DH) Kronecker K_D (x) K_H

        def gconv(x):
            """Separable 3D Gaussian blur of x: (N, C, D, H, W), zero pad."""
            # W axis: one batched MXU matmul over all bases, W stays in lanes.
            y = jnp.dot(jnp.reshape(x, (NC * DH, W)), kw,
                        preferred_element_type=jnp.float32)
            y = jnp.reshape(y, (NC, DH, W))
            # D & H axes fused via the Kronecker conv matrix: one small MXU
            # matmul per (n, c) slab (NC is tiny), staged in VMEM scratch.
            for b in range(NC):
                dh_scr[b] = jnp.dot(kdh, y[b],
                                    preferred_element_type=jnp.float32)
            return jnp.reshape(dh_scr[...], (N, C, D, H, W))

        v = vout_ref[...]                              # (N, C, D, H, W)
        bases = bases_ref[...]
        prev_b = bary_ref[0]                           # (C, D, H, W)

        w = bases * pl.reciprocal(gconv(v * aw) + eps, approx=False)
        d = v * gconv(w * aw)
        logd = jnp.log(d + eps)

        logsum = alpha_ref[0] * logd[0]
        for n in range(1, N):
            logsum = logsum + alpha_ref[n] * logd[n]
        new_b = jnp.exp(logsum)                        # (C, D, H, W)

        # finiteness check (matches torch: isnan/isinf on barycenter only)
        fmax = jnp.float32(np.finfo(np.float32).max)
        ok = jnp.logical_and(new_b == new_b, jnp.abs(new_b) <= fmax)
        finite = jnp.min(ok.astype(jnp.float32)) > 0.5

        @pl.when(finite)
        def _commit():
            new_v = v * new_b * pl.reciprocal(d + eps, approx=False)
            change = jnp.sum(jnp.abs(prev_b - new_b)) * aw
            bary_ref[0] = new_b.astype(bary_ref.dtype)
            vout_ref[...] = new_v.astype(vout_ref.dtype)
            converged = jnp.logical_and(i > 0, change < tol)
            state_ref[0] = converged.astype(jnp.int32)

        @pl.when(jnp.logical_not(finite))
        def _halt():                                   # revert == don't commit
            state_ref[0] = jnp.int32(1)


def make_wasserstein_forward(bases_shape, dtype, *, sigma, kernel_size,
                             niter, tol, eps, norm_type):
    N, C, D, H, W = bases_shape
    taps = _gaussian_taps(sigma, kernel_size)
    kw_mat = jnp.asarray(_conv_matrix(W, taps))
    kdh_mat = jnp.asarray(np.kron(_conv_matrix(D, taps),
                                  _conv_matrix(H, taps)))
    aw = 1.0 / float(D * H * W)                        # uniform area weight

    kernel = functools.partial(
        _fused_sinkhorn_kernel, eps=float(eps), aw=aw, tol=float(tol))

    full5 = lambda i: (0, 0, 0, 0, 0)
    mat2 = lambda i: (0, 0)
    call = pl.pallas_call(
        kernel,
        grid=(niter,),
        in_specs=[
            pl.BlockSpec(memory_space=pltpu.MemorySpace.SMEM),    # alpha (N,)
            pl.BlockSpec((N, C, D, H, W), full5),                 # bases
            pl.BlockSpec((W, W), mat2),                           # K_W
            pl.BlockSpec((D * H, D * H), mat2),                   # K_D (x) K_H
        ],
        out_specs=(
            pl.BlockSpec((1, C, D, H, W), full5),                 # barycenter
            pl.BlockSpec((N, C, D, H, W), full5),                 # v
        ),
        out_shape=(
            jax.ShapeDtypeStruct((1, C, D, H, W), dtype),
            jax.ShapeDtypeStruct((N, C, D, H, W), dtype),
        ),
        scratch_shapes=[
            pltpu.VMEM((N * C, D * H, W), jnp.float32),           # DH-conv stage
            pltpu.SMEM((1,), jnp.int32),                          # done flag
        ],
        compiler_params=pltpu.CompilerParams(
            dimension_semantics=("arbitrary",)),
    )

    @jax.jit
    def forward(bases, alpha):
        bary, v = call(alpha, bases, kw_mat, kdh_mat)
        if norm_type == 'var':
            inv_var = 1.0 / jnp.var(jnp.reshape(bases, (N, -1)), axis=1, ddof=1)
            bary = bary * jnp.dot(inv_var, alpha)
        else:  # 'max'
            bary = bary / jnp.max(bary)
        return bary, v

    return forward


# ------------------------- forward (module semantics) ------------------------

def wasserstein_interpolate_forward(bases, alpha, *, sigma=1.0,
                                    kernel_size=None, niter=10, tol=1e-7,
                                    eps=1e-7, norm_type='max'):
    bases = jnp.asarray(bases, jnp.float32)
    alpha = jnp.asarray(alpha, jnp.float32)
    if kernel_size is None:
        kernel_size = max(bases.shape[2:])
    fwd = make_wasserstein_forward(
        bases.shape, bases.dtype, sigma=sigma, kernel_size=kernel_size,
        niter=niter, tol=tol, eps=eps, norm_type=norm_type)
    return fwd(bases, alpha)


# ------------------------- pure-JAX reference (check) ------------------------

def _ref_forward(bases, alpha, sigma, kernel_size, niter, tol, eps, norm_type):
    bases = jnp.asarray(bases, jnp.float32)
    N, C, D, H, W = bases.shape
    aw = 1.0 / float(D * H * W)
    taps = _gaussian_taps(sigma, kernel_size)
    K_D = jnp.asarray(_conv_matrix(D, taps))
    K_H = jnp.asarray(_conv_matrix(H, taps))
    K_W = jnp.asarray(_conv_matrix(W, taps))

    def gconv(x):  # (N, C, D, H, W)
        y = jnp.einsum('ij,ncdhj->ncdhi', K_W, x, precision='highest')
        y = jnp.einsum('ij,ncdjw->ncdiw', K_H, y, precision='highest')
        y = jnp.einsum('ij,ncjhw->ncihw', K_D, y, precision='highest')
        return y

    v = jnp.ones_like(bases)
    b = jnp.ones((1, C, D, H, W), bases.dtype)
    a = jnp.asarray(alpha, jnp.float32).reshape((N, 1, 1, 1, 1))
    for i in range(niter):
        prev_b, prev_v = b, v
        w = bases / (gconv(v * aw) + eps)
        d = v * gconv(w * aw)
        b_new = jnp.exp(jnp.sum(jnp.log(d + eps) * a, axis=0, keepdims=True))
        v_new = v * b_new / (d + eps)
        if bool(jnp.any(~jnp.isfinite(b_new))):
            b, v = prev_b, prev_v
            break
        change = float(jnp.sum(jnp.abs(prev_b - b_new)) * aw)
        b, v = b_new, v_new
        if i > 0 and change < tol:
            break
    if norm_type == 'max':
        b = b / jnp.max(b)
    return b, v


# ----------------------------------- main ------------------------------------

if __name__ == "__main__":
    key = jax.random.PRNGKey(0)
    N, C, D, H, W = 2, 1, 4, 8, 128
    # bases are positive "densities"
    bases = jax.random.uniform(key, (N, C, D, H, W), jnp.float32,
                               minval=0.1, maxval=1.0)

    alpha_zero = jnp.zeros((N,), jnp.float32)                     # param init
    alpha_onehot = jnp.zeros((N,), jnp.float32).at[0].set(1.0)    # one_hot_(0)
    alpha_mix = jnp.asarray([0.3, 0.7], jnp.float32)

    def check(bary, v, bary_ref, v_ref):
        assert bary.shape == (1, C, D, H, W) and v.shape == (N, C, D, H, W)
        assert bool(jnp.all(jnp.isfinite(bary))) and bool(jnp.all(jnp.isfinite(v)))
        assert bool(jnp.allclose(bary, bary_ref, rtol=1e-2, atol=1e-3)), \
            "barycenter mismatch vs pure-JAX reference"
        assert bool(jnp.allclose(v, v_ref, rtol=1e-2, atol=1e-3)), \
            "v mismatch vs pure-JAX reference"

    # Compile once per kernel_size, reuse across alphas.
    fwd5 = make_wasserstein_forward(
        bases.shape, bases.dtype, sigma=1.0, kernel_size=5, niter=10,
        tol=1e-7, eps=1e-7, norm_type='max')
    for alpha in (alpha_zero, alpha_onehot, alpha_mix):
        bary, v = fwd5(bases, alpha)
        jax.block_until_ready((bary, v))
        bary_ref, v_ref = _ref_forward(
            bases, alpha, sigma=1.0, kernel_size=5, niter=10,
            tol=1e-7, eps=1e-7, norm_type='max')
        check(bary, v, bary_ref, v_ref)

    # Module default kernel_size = max(spatial) (exercises the dense conv mats).
    ksN = max(D, H, W)
    fwdN = make_wasserstein_forward(
        bases.shape, bases.dtype, sigma=1.0, kernel_size=ksN, niter=10,
        tol=1e-7, eps=1e-7, norm_type='max')
    bary, v = fwdN(bases, alpha_mix)
    jax.block_until_ready((bary, v))
    bary_ref, v_ref = _ref_forward(
        bases, alpha_mix, sigma=1.0, kernel_size=ksN, niter=10,
        tol=1e-7, eps=1e-7, norm_type='max')
    check(bary, v, bary_ref, v_ref)

    print("KERNEL_OK")
</pallas_src>

<mosaic_0001>
module attributes {stable_mosaic.version = 11 : i64} {
  func.func @_fused_sinkhorn_kernel(%arg0: i32, %arg1: memref<2xf32, #tpu.memory_space<smem>>, %arg2: memref<2x1x4x8x128xf32, #tpu.memory_space<vmem>>, %arg3: memref<128x128xf32, #tpu.memory_space<vmem>>, %arg4: memref<32x32xf32, #tpu.memory_space<vmem>>, %arg5: memref<1x1x4x8x128xf32, #tpu.memory_space<vmem>>, %arg6: memref<2x1x4x8x128xf32, #tpu.memory_space<vmem>>, %arg7: memref<2x32x128xf32, #tpu.memory_space<vmem>>, %arg8: memref<1xi32, #tpu.memory_space<smem>>) attributes {dimension_semantics = [#tpu.dimension_semantics<arbitrary>], iteration_bounds = array<i64: 10>, scalar_prefetch = 0 : i64, scratch_operands = 2 : i64, tpu.core_type = #tpu.core_type<tc>, window_params = [{transform_indices = @transform_0, window_bounds = array<i64: 2>}, {pipeline_mode = #tpu.pipeline_mode<synchronous>, transform_indices = @transform_1, window_bounds = array<i64: 2, 1, 4, 8, 128>}, {pipeline_mode = #tpu.pipeline_mode<synchronous>, transform_indices = @transform_2, window_bounds = array<i64: 128, 128>}, {pipeline_mode = #tpu.pipeline_mode<synchronous>, transform_indices = @transform_3, window_bounds = array<i64: 32, 32>}, {pipeline_mode = #tpu.pipeline_mode<synchronous>, transform_indices = @transform_4, window_bounds = array<i64: 1, 1, 4, 8, 128>}, {pipeline_mode = #tpu.pipeline_mode<synchronous>, transform_indices = @transform_5, window_bounds = array<i64: 2, 1, 4, 8, 128>}]} {
    %c0_i32 = arith.constant 0 : i32
    %0 = arith.cmpi eq, %arg0, %c0_i32 : i32
    %1 = arith.extui %0 : i1 to i32
    %c0_i32_0 = arith.constant 0 : i32
    %2 = arith.cmpi ne, %1, %c0_i32_0 : i32
    scf.if %2 {
      %cst = arith.constant 1.000000e+00 : f32
      %7 = vector.broadcast %cst : f32 to vector<1x1x4x8x128xf32>
      %c0_3 = arith.constant 0 : index
      %c0_4 = arith.constant 0 : index
      %c0_5 = arith.constant 0 : index
      %c0_6 = arith.constant 0 : index
      %c0_7 = arith.constant 0 : index
      %8 = vector.load %arg5[%c0_3, %c0_4, %c0_5, %c0_6, %c0_7] : memref<1x1x4x8x128xf32, #tpu.memory_space<vmem>>, vector<1x1x4x8x128xf32>
      tpu.vector_store %arg5[%c0_3, %c0_4, %c0_5, %c0_6, %c0_7], %7 {strides = array<i32>} : memref<1x1x4x8x128xf32, #tpu.memory_space<vmem>>, vector<1x1x4x8x128xf32>,
      %cst_8 = arith.constant 1.000000e+00 : f32
      %9 = vector.broadcast %cst_8 : f32 to vector<2x1x4x8x128xf32>
      %c0_9 = arith.constant 0 : index
      %c0_10 = arith.constant 0 : index
      %c0_11 = arith.constant 0 : index
      %c0_12 = arith.constant 0 : index
      %c0_13 = arith.constant 0 : index
      %10 = vector.load %arg6[%c0_9, %c0_10, %c0_11, %c0_12, %c0_13] : memref<2x1x4x8x128xf32, #tpu.memory_space<vmem>>, vector<2x1x4x8x128xf32>
      tpu.vector_store %arg6[%c0_9, %c0_10, %c0_11, %c0_12, %c0_13], %9 {strides = array<i32>} : memref<2x1x4x8x128xf32, #tpu.memory_space<vmem>>, vector<2x1x4x8x128xf32>,
      %c0_i32_14 = arith.constant 0 : i32
      %c0_15 = arith.constant 0 : index
      %11 = memref.load %arg8[%c0_15] : memref<1xi32, #tpu.memory_space<smem>>
      memref.store %c0_i32_14, %arg8[%c0_15] : memref<1xi32, #tpu.memory_space<smem>>
    } else {
    }
    %c0 = arith.constant 0 : index
    %3 = memref.load %arg8[%c0] : memref<1xi32, #tpu.memory_space<smem>>
    %c0_i32_1 = arith.constant 0 : i32
    %4 = arith.cmpi eq, %3, %c0_i32_1 : i32
    %5 = arith.extui %4 : i1 to i32
    %c0_i32_2 = arith.constant 0 : i32
    %6 = arith.cmpi ne, %5, %c0_i32_2 : i32
    scf.if %6 {
      %c0_3 = arith.constant 0 : index
      %c0_4 = arith.constant 0 : index
      %7 = vector.load %arg3[%c0_3, %c0_4] : memref<128x128xf32, #tpu.memory_space<vmem>>, vector<128x128xf32>
      %c0_5 = arith.constant 0 : index
      %c0_6 = arith.constant 0 : index
      %8 = vector.load %arg4[%c0_5, %c0_6] : memref<32x32xf32, #tpu.memory_space<vmem>>, vector<32x32xf32>
      %c0_7 = arith.constant 0 : index
      %c0_8 = arith.constant 0 : index
      %c0_9 = arith.constant 0 : index
      %c0_10 = arith.constant 0 : index
      %c0_11 = arith.constant 0 : index
      %9 = vector.load %arg6[%c0_7, %c0_8, %c0_9, %c0_10, %c0_11] : memref<2x1x4x8x128xf32, #tpu.memory_space<vmem>>, vector<2x1x4x8x128xf32>
      %c0_12 = arith.constant 0 : index
      %c0_13 = arith.constant 0 : index
      %c0_14 = arith.constant 0 : index
      %c0_15 = arith.constant 0 : index
      %c0_16 = arith.constant 0 : index
      %10 = vector.load %arg2[%c0_12, %c0_13, %c0_14, %c0_15, %c0_16] : memref<2x1x4x8x128xf32, #tpu.memory_space<vmem>>, vector<2x1x4x8x128xf32>
      %c0_17 = arith.constant 0 : index
      %c0_18 = arith.constant 0 : index
      %c0_19 = arith.constant 0 : index
      %c0_20 = arith.constant 0 : index
      %c0_21 = arith.constant 0 : index
      %11 = vector.load %arg5[%c0_17, %c0_18, %c0_19, %c0_20, %c0_21] : memref<1x1x4x8x128xf32, #tpu.memory_space<vmem>>, vector<1x1x4x8x128xf32>
      %12 = vector.shape_cast %11 : vector<1x1x4x8x128xf32> to vector<1x4x8x128xf32>
      %cst = arith.constant 2.44140625E-4 : f32
      %13 = vector.broadcast %cst : f32 to vector<2x1x4x8x128xf32>
      %14 = arith.mulf %9, %13 : vector<2x1x4x8x128xf32>
      %15 = vector.shape_cast %14 : vector<2x1x4x8x128xf32> to vector<64x128xf32>
      %cst_22 = arith.constant dense<0.000000e+00> : vector<64x128xf32>
      %16 = tpu.matmul %15, %7, %cst_22 {dimension_numbers = #tpu.dot_dimension_numbers<[1], [0], [0], [1], [0, 0, 1, 1], [], []>} : vector<64x128xf32>, vector<128x128xf32>, vector<64x128xf32> -> vector<64x128xf32>
      %17 = vector.shape_cast %16 : vector<64x128xf32> to vector<2x32x128xf32>
      %18 = vector.extract_strided_slice %17 {offsets = [0, 0, 0], sizes = [1, 32, 128], strides = [1, 1, 1]} : vector<2x32x128xf32> to vector<1x32x128xf32>
      %19 = vector.shape_cast %18 : vector<1x32x128xf32> to vector<32x128xf32>
      %cst_23 = arith.constant dense<0.000000e+00> : vector<32x128xf32>
      %20 = tpu.matmul %8, %19, %cst_23 {dimension_numbers = #tpu.dot_dimension_numbers<[1], [0], [0], [1], [0, 0, 1, 1], [], []>} : vector<32x32xf32>, vector<32x128xf32>, vector<32x128xf32> -> vector<32x128xf32>
      %c0_24 = arith.constant 0 : index
      %c0_25 = arith.constant 0 : index
      %c0_26 = arith.constant 0 : index
      %21 = vector.load %arg7[%c0_24, %c0_25, %c0_26] : memref<2x32x128xf32, #tpu.memory_space<vmem>>, vector<1x32x128xf32>
      %22 = vector.shape_cast %21 : vector<1x32x128xf32> to vector<32x128xf32>
      %23 = vector.shape_cast %20 : vector<32x128xf32> to vector<1x32x128xf32>
      tpu.vector_store %arg7[%c0_24, %c0_25, %c0_26], %23 {strides = array<i32>} : memref<2x32x128xf32, #tpu.memory_space<vmem>>, vector<1x32x128xf32>,
      %24 = vector.extract_strided_slice %17 {offsets = [1, 0, 0], sizes = [1, 32, 128], strides = [1, 1, 1]} : vector<2x32x128xf32> to vector<1x32x128xf32>
      %25 = vector.shape_cast %24 : vector<1x32x128xf32> to vector<32x128xf32>
      %cst_27 = arith.constant dense<0.000000e+00> : vector<32x128xf32>
      %26 = tpu.matmul %8, %25, %cst_27 {dimension_numbers = #tpu.dot_dimension_numbers<[1], [0], [0], [1], [0, 0, 1, 1], [], []>} : vector<32x32xf32>, vector<32x128xf32>, vector<32x128xf32> -> vector<32x128xf32>
      %c1 = arith.constant 1 : index
      %c0_28 = arith.constant 0 : index
      %c0_29 = arith.constant 0 : index
      %27 = vector.load %arg7[%c1, %c0_28, %c0_29] : memref<2x32x128xf32, #tpu.memory_space<vmem>>, vector<1x32x128xf32>
      %28 = vector.shape_cast %27 : vector<1x32x128xf32> to vector<32x128xf32>
      %29 = vector.shape_cast %26 : vector<32x128xf32> to vector<1x32x128xf32>
      tpu.vector_store %arg7[%c1, %c0_28, %c0_29], %29 {strides = array<i32>} : memref<2x32x128xf32, #tpu.memory_space<vmem>>, vector<1x32x128xf32>,
      %c0_30 = arith.constant 0 : index
      %c0_31 = arith.constant 0 : index
      %c0_32 = arith.constant 0 : index
      %30 = vector.load %arg7[%c0_30, %c0_31, %c0_32] : memref<2x32x128xf32, #tpu.memory_space<vmem>>, vector<2x32x128xf32>
      %31 = vector.shape_cast %30 : vector<2x32x128xf32> to vector<2x1x4x8x128xf32>
      %cst_33 = arith.constant 1.000000e-07 : f32
      %32 = vector.broadcast %cst_33 : f32 to vector<2x1x4x8x128xf32>
      %33 = arith.addf %31, %32 : vector<2x1x4x8x128xf32>
      %34 = tpu.reciprocal %33 : vector<2x1x4x8x128xf32> -> vector<2x1x4x8x128xf32>
      %35 = arith.mulf %10, %34 : vector<2x1x4x8x128xf32>
      %cst_34 = arith.constant 2.44140625E-4 : f32
      %36 = vector.broadcast %cst_34 : f32 to vector<2x1x4x8x128xf32>
      %37 = arith.mulf %35, %36 : vector<2x1x4x8x128xf32>
      %38 = vector.shape_cast %37 : vector<2x1x4x8x128xf32> to vector<64x128xf32>
      %cst_35 = arith.constant dense<0.000000e+00> : vector<64x128xf32>
      %39 = tpu.matmul %38, %7, %cst_35 {dimension_numbers = #tpu.dot_dimension_numbers<[1], [0], [0], [1], [0, 0, 1, 1], [], []>} : vector<64x128xf32>, vector<128x128xf32>, vector<64x128xf32> -> vector<64x128xf32>
      %40 = vector.shape_cast %39 : vector<64x128xf32> to vector<2x32x128xf32>
      %41 = vector.extract_strided_slice %40 {offsets = [0, 0, 0], sizes = [1, 32, 128], strides = [1, 1, 1]} : vector<2x32x128xf32> to vector<1x32x128xf32>
      %42 = vector.shape_cast %41 : vector<1x32x128xf32> to vector<32x128xf32>
      %cst_36 = arith.constant dense<0.000000e+00> : vector<32x128xf32>
      %43 = tpu.matmul %8, %42, %cst_36 {dimension_numbers = #tpu.dot_dimension_numbers<[1], [0], [0], [1], [0, 0, 1, 1], [], []>} : vector<32x32xf32>, vector<32x128xf32>, vector<32x128xf32> -> vector<32x128xf32>
      %c0_37 = arith.constant 0 : index
      %c0_38 = arith.constant 0 : index
      %c0_39 = arith.constant 0 : index
      %44 = vector.load %arg7[%c0_37, %c0_38, %c0_39] : memref<2x32x128xf32, #tpu.memory_space<vmem>>, vector<1x32x128xf32>
      %45 = vector.shape_cast %44 : vector<1x32x128xf32> to vector<32x128xf32>
      %46 = vector.shape_cast %43 : vector<32x128xf32> to vector<1x32x128xf32>
      tpu.vector_store %arg7[%c0_37, %c0_38, %c0_39], %46 {strides = array<i32>} : memref<2x32x128xf32, #tpu.memory_space<vmem>>, vector<1x32x128xf32>,
      %47 = vector.extract_strided_slice %40 {offsets = [1, 0, 0], sizes = [1, 32, 128], strides = [1, 1, 1]} : vector<2x32x128xf32> to vector<1x32x128xf32>
      %48 = vector.shape_cast %47 : vector<1x32x128xf32> to vector<32x128xf32>
      %cst_40 = arith.constant dense<0.000000e+00> : vector<32x128xf32>
      %49 = tpu.matmul %8, %48, %cst_40 {dimension_numbers = #tpu.dot_dimension_numbers<[1], [0], [0], [1], [0, 0, 1, 1], [], []>} : vector<32x32xf32>, vector<32x128xf32>, vector<32x128xf32> -> vector<32x128xf32>
      %c1_41 = arith.constant 1 : index
      %c0_42 = arith.constant 0 : index
      %c0_43 = arith.constant 0 : index
      %50 = vector.load %arg7[%c1_41, %c0_42, %c0_43] : memref<2x32x128xf32, #tpu.memory_space<vmem>>, vector<1x32x128xf32>
      %51 = vector.shape_cast %50 : vector<1x32x128xf32> to vector<32x128xf32>
      %52 = vector.shape_cast %49 : vector<32x128xf32> to vector<1x32x128xf32>
      tpu.vector_store %arg7[%c1_41, %c0_42, %c0_43], %52 {strides = array<i32>} : memref<2x32x128xf32, #tpu.memory_space<vmem>>, vector<1x32x128xf32>,
      %c0_44 = arith.constant 0 : index
      %c0_45 = arith.constant 0 : index
      %c0_46 = arith.constant 0 : index
      %53 = vector.load %arg7[%c0_44, %c0_45, %c0_46] : memref<2x32x128xf32, #tpu.memory_space<vmem>>, vector<2x32x128xf32>
      %54 = vector.shape_cast %53 : vector<2x32x128xf32> to vector<2x1x4x8x128xf32>
      %55 = arith.mulf %9, %54 : vector<2x1x4x8x128xf32>
      %cst_47 = arith.constant 1.000000e-07 : f32
      %56 = vector.broadcast %cst_47 : f32 to vector<2x1x4x8x128xf32>
      %57 = arith.addf %55, %56 : vector<2x1x4x8x128xf32>
      %58 = math.log %57 : vector<2x1x4x8x128xf32>
      %c0_48 = arith.constant 0 : index
      %59 = memref.load %arg1[%c0_48] : memref<2xf32, #tpu.memory_space<smem>>
      %60 = vector.extract_strided_slice %58 {offsets = [0, 0, 0, 0, 0], sizes = [1, 1, 4, 8, 128], strides = [1, 1, 1, 1, 1]} : vector<2x1x4x8x128xf32> to vector<1x1x4x8x128xf32>
      %61 = vector.shape_cast %60 : vector<1x1x4x8x128xf32> to vector<1x4x8x128xf32>
      %62 = vector.broadcast %59 : f32 to vector<1x4x8x128xf32>
      %63 = arith.mulf %62, %61 : vector<1x4x8x128xf32>
      %c1_49 = arith.constant 1 : index
      %64 = memref.load %arg1[%c1_49] : memref<2xf32, #tpu.memory_space<smem>>
      %65 = vector.extract_strided_slice %58 {offsets = [1, 0, 0, 0, 0], sizes = [1, 1, 4, 8, 128], strides = [1, 1, 1, 1, 1]} : vector<2x1x4x8x128xf32> to vector<1x1x4x8x128xf32>
      %66 = vector.shape_cast %65 : vector<1x1x4x8x128xf32> to vector<1x4x8x128xf32>
      %67 = vector.broadcast %64 : f32 to vector<1x4x8x128xf32>
      %68 = arith.mulf %67, %66 : vector<1x4x8x128xf32>
      %69 = arith.addf %63, %68 : vector<1x4x8x128xf32>
      %70 = math.exp %69 : vector<1x4x8x128xf32>
      %71 = arith.cmpf oeq, %70, %70 : vector<1x4x8x128xf32>
      %72 = math.absf %70 : vector<1x4x8x128xf32>
      %cst_50 = arith.constant 3.40282347E+38 : f32
      %73 = vector.broadcast %cst_50 : f32 to vector<1x4x8x128xf32>
      %74 = arith.cmpf ole, %72, %73 : vector<1x4x8x128xf32>
      %75 = arith.andi %71, %74 : vector<1x4x8x128xi1>
      %76 = arith.extui %75 : vector<1x4x8x128xi1> to vector<1x4x8x128xi32>
      %77 = arith.sitofp %76 : vector<1x4x8x128xi32> to vector<1x4x8x128xf32>
      %78 = vector.shape_cast %77 : vector<1x4x8x128xf32> to vector<1x1x4x8x128xf32>
      %cst_51 = arith.constant dense<0x7F800000> : vector<1xf32>
      %79 = vector.multi_reduction <minimumf>, %78, %cst_51 [1, 2, 3, 4] : vector<1x1x4x8x128xf32> to vector<1xf32>
      %80 = vector.shape_cast %79 : vector<1xf32> to vector<1x1x1x1x1xf32>
      %81 = vector.extract %80[0, 0, 0, 0, 0] : f32 from vector<1x1x1x1x1xf32>
      %cst_52 = arith.constant 5.000000e-01 : f32
      %82 = arith.cmpf ogt, %81, %cst_52 : f32
      %83 = arith.extui %82 : i1 to i32
      %c0_i32_53 = arith.constant 0 : i32
      %84 = arith.cmpi ne, %83, %c0_i32_53 : i32
      scf.if %84 {
        %88 = vector.shape_cast %70 : vector<1x4x8x128xf32> to vector<1x1x4x8x128xf32>
        %89 = vector.broadcast %88 : vector<1x1x4x8x128xf32> to vector<2x1x4x8x128xf32>
        %90 = arith.mulf %9, %89 : vector<2x1x4x8x128xf32>
        %cst_55 = arith.constant 1.000000e-07 : f32
        %91 = vector.broadcast %cst_55 : f32 to vector<2x1x4x8x128xf32>
        %92 = arith.addf %55, %91 : vector<2x1x4x8x128xf32>
        %93 = tpu.reciprocal %92 : vector<2x1x4x8x128xf32> -> vector<2x1x4x8x128xf32>
        %94 = arith.mulf %90, %93 : vector<2x1x4x8x128xf32>
        %95 = arith.subf %12, %70 : vector<1x4x8x128xf32>
        %96 = math.absf %95 : vector<1x4x8x128xf32>
        %97 = vector.shape_cast %96 : vector<1x4x8x128xf32> to vector<1x1x4x8x128xf32>
        %cst_56 = arith.constant dense<0.000000e+00> : vector<1xf32>
        %98 = vector.multi_reduction <add>, %97, %cst_56 [1, 2, 3, 4] : vector<1x1x4x8x128xf32> to vector<1xf32>
        %99 = vector.shape_cast %98 : vector<1xf32> to vector<1x1x1x1x1xf32>
        %100 = vector.extract %99[0, 0, 0, 0, 0] : f32 from vector<1x1x1x1x1xf32>
        %cst_57 = arith.constant 2.44140625E-4 : f32
        %101 = arith.mulf %100, %cst_57 : f32
        %c0_58 = arith.constant 0 : index
        %c0_59 = arith.constant 0 : index
        %c0_60 = arith.constant 0 : index
        %c0_61 = arith.constant 0 : index
        %c0_62 = arith.constant 0 : index
        %102 = vector.load %arg5[%c0_58, %c0_59, %c0_60, %c0_61, %c0_62] : memref<1x1x4x8x128xf32, #tpu.memory_space<vmem>>, vector<1x1x4x8x128xf32>
        %103 = vector.shape_cast %102 : vector<1x1x4x8x128xf32> to vector<1x4x8x128xf32>
        %104 = vector.shape_cast %70 : vector<1x4x8x128xf32> to vector<1x1x4x8x128xf32>
        tpu.vector_store %arg5[%c0_58, %c0_59, %c0_60, %c0_61, %c0_62], %104 {strides = array<i32>} : memref<1x1x4x8x128xf32, #tpu.memory_space<vmem>>, vector<1x1x4x8x128xf32>,
        %c0_63 = arith.constant 0 : index
        %c0_64 = arith.constant 0 : index
        %c0_65 = arith.constant 0 : index
        %c0_66 = arith.constant 0 : index
        %c0_67 = arith.constant 0 : index
        %105 = vector.load %arg6[%c0_63, %c0_64, %c0_65, %c0_66, %c0_67] : memref<2x1x4x8x128xf32, #tpu.memory_space<vmem>>, vector<2x1x4x8x128xf32>
        tpu.vector_store %arg6[%c0_63, %c0_64, %c0_65, %c0_66, %c0_67], %94 {strides = array<i32>} : memref<2x1x4x8x128xf32, #tpu.memory_space<vmem>>, vector<2x1x4x8x128xf32>,
        %c0_i32_68 = arith.constant 0 : i32
        %106 = arith.cmpi sgt, %arg0, %c0_i32_68 : i32
        %cst_69 = arith.constant 1.000000e-07 : f32
        %107 = arith.cmpf olt, %101, %cst_69 : f32
        %108 = arith.andi %106, %107 : i1
        %109 = arith.extui %108 : i1 to i32
        %c0_70 = arith.constant 0 : index
        %110 = memref.load %arg8[%c0_70] : memref<1xi32, #tpu.memory_space<smem>>
        memref.store %109, %arg8[%c0_70] : memref<1xi32, #tpu.memory_space<smem>>
      } else {
      }
      %true = arith.constant true
      %85 = arith.xori %82, %true : i1
      %86 = arith.extui %85 : i1 to i32
      %c0_i32_54 = arith.constant 0 : i32
      %87 = arith.cmpi ne, %86, %c0_i32_54 : i32
      scf.if %87 {
        %c1_i32 = arith.constant 1 : i32
        %c0_55 = arith.constant 0 : index
        %88 = memref.load %arg8[%c0_55] : memref<1xi32, #tpu.memory_space<smem>>
        memref.store %c1_i32, %arg8[%c0_55] : memref<1xi32, #tpu.memory_space<smem>>
      } else {
      }
    } else {
    }
    return
  }
  func.func @transform_0(%arg0: i32) -> i32 {
    %c0_i32 = arith.constant 0 : i32
    %c0_i32_0 = arith.constant 0 : i32
    return %c0_i32 : i32
  }
  func.func @transform_1(%arg0: i32) -> (i32, i32, i32, i32, i32) {
    %c0_i32 = arith.constant 0 : i32
    %c0_i32_0 = arith.constant 0 : i32
    %c0_i32_1 = arith.constant 0 : i32
    %c0_i32_2 = arith.constant 0 : i32
    %c0_i32_3 = arith.constant 0 : i32
    %c0_i32_4 = arith.constant 0 : i32
    return %c0_i32, %c0_i32_0, %c0_i32_1, %c0_i32_2, %c0_i32_3 : i32, i32, i32, i32, i32
  }
  func.func @transform_2(%arg0: i32) -> (i32, i32) {
    %c0_i32 = arith.constant 0 : i32
    %c0_i32_0 = arith.constant 0 : i32
    %c0_i32_1 = arith.constant 0 : i32
    return %c0_i32, %c0_i32_0 : i32, i32
  }
  func.func @transform_3(%arg0: i32) -> (i32, i32) {
    %c0_i32 = arith.constant 0 : i32
    %c0_i32_0 = arith.constant 0 : i32
    %c0_i32_1 = arith.constant 0 : i32
    return %c0_i32, %c0_i32_0 : i32, i32
  }
  func.func @transform_4(%arg0: i32) -> (i32, i32, i32, i32, i32) {
    %c0_i32 = arith.constant 0 : i32
    %c0_i32_0 = arith.constant 0 : i32
    %c0_i32_1 = arith.constant 0 : i32
    %c0_i32_2 = arith.constant 0 : i32
    %c0_i32_3 = arith.constant 0 : i32
    %c0_i32_4 = arith.constant 0 : i32
    return %c0_i32, %c0_i32_0, %c0_i32_1, %c0_i32_2, %c0_i32_3 : i32, i32, i32, i32, i32
  }
  func.func @transform_5(%arg0: i32) -> (i32, i32, i32, i32, i32) {
    %c0_i32 = arith.constant 0 : i32
    %c0_i32_0 = arith.constant 0 : i32
    %c0_i32_1 = arith.constant 0 : i32
    %c0_i32_2 = arith.constant 0 : i32
    %c0_i32_3 = arith.constant 0 : i32
    %c0_i32_4 = arith.constant 0 : i32
    return %c0_i32, %c0_i32_0, %c0_i32_1, %c0_i32_2, %c0_i32_3 : i32, i32, i32, i32, i32
  }
}

</mosaic_0001>

<llo_original>
// kernel: forward.1
$region0: #{forward.1}
  #allocation0 [shape = 'u32[]', space=smem, size = 0x4, offset = 0x4, fixed_abs, tag = 'smem constant byte address 0x4 - core index']
  #allocation1 [shape = 'u32[72,128]{1,0:T(1,128)}', space=vmem, size = 0x9000, scoped, tag = 'internal scratch']
  #allocation2 [shape = 'f32[2,32,128]{2,1,0:T(8,128)}', space=vmem, size = 0x8000, scoped, tag = 'scratch operand']
  #allocation3 [shape = 's32[1]{0:T(128)}', space=smem, size = 0x200, scoped, tag = 'scratch operand']
  %s0 = inlined_call_operand.hbm [shape: f32[2], index: 0, kind: input, shape index: {}]
  %s1 = inlined_call_operand.hbm [shape: f32[2,1,4,8,128], index: 1, kind: input, shape index: {}]
  %s2 = inlined_call_operand.hbm [shape: f32[128,128], index: 2, kind: input, shape index: {}]
  %s3 = inlined_call_operand.hbm [shape: f32[32,32], index: 3, kind: input, shape index: {}]
  %s4 = inlined_call_operand.vmem [shape: f32[1,1,4,8,128], index: 4, kind: output, shape index: {0}]
  %s5 = inlined_call_operand.hbm [shape: f32[2,1,4,8,128], index: 5, kind: output, shape index: {1}]
  %6 = xla_tuple %s4, %s5
  %s7 = sld [smem:[#allocation0]]
  $region89: #{forward.1} parent=0
    _
  %s9 = ssub.s32 1, %s7
  %s10 = scalar_select 0, %s9, %s7
  $region1: #{forward.1} parent=0
    #allocation4 [shape = 'u8[512]{0}', space=smem, size = 0x200, scoped, tag = 'input window, operand 0, single buffered']
    #allocation5 [shape = 's32[2]{0}', space=sflag, size = 0x8, scoped, tag = 'scoped memory for forward.1']
    #allocation6 [shape = 's32[2]{0}', space=sflag, size = 0x8, scoped, tag = 'scoped memory for forward.1']
    #allocation7 [shape = 's32[2]{0}', space=sflag, size = 0x8, scoped, tag = 'scoped memory for forward.1']
    #allocation8 [shape = 'u8[32768]{0}', space=vmem, size = 0x8000, scoped, tag = 'input window, operand 1, single buffered']
    #allocation9 [shape = 'u8[65536]{0}', space=vmem, size = 0x10000, scoped, tag = 'input window, operand 2, single buffered']
    #allocation10 [shape = 's32[1]{0}', space=sflag, size = 0x4, scoped, tag = 'scoped memory for forward.1']
    #allocation11 [shape = 'u8[16384]{0}', space=vmem, size = 0x4000, scoped, tag = 'input window, operand 3, single buffered']
    #allocation12 [shape = 'u8[32768]{0}', space=vmem, size = 0x8000, scoped, tag = 'output window, operand 1, single buffered']
    %11 = vsyncpa [#allocation7], 0
    %12 = vsyncpa [#allocation5], 0
    %13 = vsyncpa [#allocation10], 0
    %14 = vsyncpa [#allocation6], 0
    loop: start=0, step=1, limit=12
    $region2: #{forward.1} parent=1 // loop_pre_header
      _
    $region3: #{forward.1} parent=1 // loop_header
      %s16 = sphi 0, %s20
      %p17 = scmp.ge.s32.totalorder %s16, 12
      %s24 = sphi 0, %s24
      %s26 = sphi 0, %s24
      %s27 = sphi 0, %s26
      %s41 = sphi 0, %s27
      %s45 = sphi 0, %s45
      %s47 = sphi 0, %s45
      %s48 = sphi 0, %s47
      %s62 = sphi 0, %s48
      %s66 = sphi 0, %s66
      %s68 = sphi 0, %s66
      %s69 = sphi 0, %s68
      %s83 = sphi 0, %s69
      %s87 = sphi 0, %s87
      %s89 = sphi 0, %s87
      %s90 = sphi 0, %s89
      %s104 = sphi 0, %s90
      %s108 = sphi 0, %s108
      %s110 = sphi 0, %s108
      %s111 = sphi 0, %s110
      %s125 = sphi 0, %s111
      %s129 = sphi 0, %s129
      %s131 = sphi 0, %s129
      %s132 = sphi 0, %s131
      %s146 = sphi 0, %s132
    $region4: #{forward.1} parent=1 // loop_header_branch
      %19 = sbr.rel (%p17) target = $region8
    $region5: #{forward.1} parent=1 // loop_body
      %s21 = ssub.s32 %s16, 1
      %s22 = ssub.s32 %s16, 2
      %s23 = sadd.s32 %s16, 1
      %s25 = sadd.s32 %s24, 1
      %p28 = scmp.eq.s32.totalorder %s16, 9
      %p29 = scmp.ne.s32.totalorder %s24, %s26
      %p30 = scmp.eq.s32.totalorder %s16, 0
      %p31 = por %p29, %p30
      %p32 = scmp.ne.s32.totalorder %s24, %s26
      %p33 = scmp.eq.s32.totalorder %s21, 9
      %p34 = por %p32, %p33
      %p35 = scmp.ne.s32.totalorder %s26, %s27
      %p36 = scmp.eq.s32.totalorder %s21, 0
      %p37 = por %p35, %p36
      %p38 = scmp.ne.s32.totalorder %s26, %s27
      %p39 = scmp.eq.s32.totalorder %s22, 9
      %p40 = por %p38, %p39
      %p42 = scmp.ne.s32.totalorder %s27, %s41
      %p43 = scmp.eq.s32.totalorder %s22, 0
      %p44 = por %p42, %p43
      %s46 = sadd.s32 %s45, 1
      %p49 = scmp.eq.s32.totalorder %s16, 9
      %p50 = scmp.ne.s32.totalorder %s45, %s47
      %p51 = scmp.eq.s32.totalorder %s16, 0
      %p52 = por %p50, %p51
      %p53 = scmp.ne.s32.totalorder %s45, %s47
      %p54 = scmp.eq.s32.totalorder %s21, 9
      %p55 = por %p53, %p54
      %p56 = scmp.ne.s32.totalorder %s47, %s48
      %p57 = scmp.eq.s32.totalorder %s21, 0
      %p58 = por %p56, %p57
      %p59 = scmp.ne.s32.totalorder %s47, %s48
      %p60 = scmp.eq.s32.totalorder %s22, 9
      %p61 = por %p59, %p60
      %p63 = scmp.ne.s32.totalorder %s48, %s62
      %p64 = scmp.eq.s32.totalorder %s22, 0
      %p65 = por %p63, %p64
      %s67 = sadd.s32 %s66, 1
      %p70 = scmp.eq.s32.totalorder %s16, 9
      %p71 = scmp.ne.s32.totalorder %s66, %s68
      %p72 = scmp.eq.s32.totalorder %s16, 0
      %p73 = por %p71, %p72
      %p74 = scmp.ne.s32.totalorder %s66, %s68
      %p75 = scmp.eq.s32.totalorder %s21, 9
      %p76 = por %p74, %p75
      %p77 = scmp.ne.s32.totalorder %s68, %s69
      %p78 = scmp.eq.s32.totalorder %s21, 0
      %p79 = por %p77, %p78
      %p80 = scmp.ne.s32.totalorder %s68, %s69
      %p81 = scmp.eq.s32.totalorder %s22, 9
      %p82 = por %p80, %p81
      %p84 = scmp.ne.s32.totalorder %s69, %s83
      %p85 = scmp.eq.s32.totalorder %s22, 0
      %p86 = por %p84, %p85
      %s88 = sadd.s32 %s87, 1
      %p91 = scmp.eq.s32.totalorder %s16, 9
      %p92 = scmp.ne.s32.totalorder %s87, %s89
      %p93 = scmp.eq.s32.totalorder %s16, 0
      %p94 = por %p92, %p93
      %p95 = scmp.ne.s32.totalorder %s87, %s89
      %p96 = scmp.eq.s32.totalorder %s21, 9
      %p97 = por %p95, %p96
      %p98 = scmp.ne.s32.totalorder %s89, %s90
      %p99 = scmp.eq.s32.totalorder %s21, 0
      %p100 = por %p98, %p99
      %p101 = scmp.ne.s32.totalorder %s89, %s90
      %p102 = scmp.eq.s32.totalorder %s22, 9
      %p103 = por %p101, %p102
      %p105 = scmp.ne.s32.totalorder %s90, %s104
      %p106 = scmp.eq.s32.totalorder %s22, 0
      %p107 = por %p105, %p106
      %s109 = sadd.s32 %s108, 1
      %p112 = scmp.eq.s32.totalorder %s16, 9
      %p113 = scmp.ne.s32.totalorder %s108, %s110
      %p114 = scmp.eq.s32.totalorder %s16, 0
      %p115 = por %p113, %p114
      %p116 = scmp.ne.s32.totalorder %s108, %s110
      %p117 = scmp.eq.s32.totalorder %s21, 9
      %p118 = por %p116, %p117
      %p119 = scmp.ne.s32.totalorder %s110, %s111
      %p120 = scmp.eq.s32.totalorder %s21, 0
      %p121 = por %p119, %p120
      %p122 = scmp.ne.s32.totalorder %s110, %s111
      %p123 = scmp.eq.s32.totalorder %s22, 9
      %p124 = por %p122, %p123
      %p126 = scmp.ne.s32.totalorder %s111, %s125
      %p127 = scmp.eq.s32.totalorder %s22, 0
      %p128 = por %p126, %p127
      %s130 = sadd.s32 %s129, 1
      %p133 = scmp.eq.s32.totalorder %s16, 9
      %p134 = scmp.ne.s32.totalorder %s129, %s131
      %p135 = scmp.eq.s32.totalorder %s16, 0
      %p136 = por %p134, %p135
      %p137 = scmp.ne.s32.totalorder %s129, %s131
      %p138 = scmp.eq.s32.totalorder %s21, 9
      %p139 = por %p137, %p138
      %p140 = scmp.ne.s32.totalorder %s131, %s132
      %p141 = scmp.eq.s32.totalorder %s21, 0
      %p142 = por %p140, %p141
      %p143 = scmp.ne.s32.totalorder %s131, %s132
      %p144 = scmp.eq.s32.totalorder %s22, 9
      %p145 = por %p143, %p144
      %p147 = scmp.ne.s32.totalorder %s132, %s146
      %p148 = scmp.eq.s32.totalorder %s22, 0
      %p149 = por %p147, %p148
      %p150 = scmp.le.s32.totalorder 1, %s16
      %p151 = scmp.lt.s32.totalorder %s16, 11
      %p152 = pnand %p150, %p151
      %p153 = pneg %p152
      // Predicated region
      $region9: #{forward.1} parent=5 // pred_check
        _
      $region10: #{forward.1} parent=5 // pred_check_branch
        %155 = sbr.rel (%p152) target = $region12
      $region11: #{forward.1} parent=5 // pred_region
        %s156 = ssub.s32 %s16, 1
        // Predicated region
        $region13: #{forward.1} parent=11 // pred_check
          %p157 = pneg %p37
        $region14: #{forward.1} parent=11 // pred_check_branch
          %159 = sbr.rel (%p157) target = $region16
        $region15: #{forward.1} parent=11 // pred_region
          %161 = vsyncadd [#allocation7], 0
          %s163 = sshll.u32 %s0, 4
          %s164 = int_to_ptr.hbm [resolvable:$true] %s163
          %166 = dma.hbm_to_smem %s164, 16, [#allocation4], [#allocation7]
        $region16: #{forward.1} parent=11 // pred_fallthru
          _
        // Predicated region
        $region17: #{forward.1} parent=11 // pred_check
          %p167 = pneg %p58
        $region18: #{forward.1} parent=11 // pred_check_branch
          %169 = sbr.rel (%p167) target = $region20
        $region19: #{forward.1} parent=11 // pred_region
          %171 = vsyncadd [#allocation5], 0
          %s172 = sshll.u32 %s1, 4
          %s173 = int_to_ptr.hbm [resolvable:$true] %s172
          %s174 = sshll.u32 [#allocation8], 4
          %s175 = int_to_ptr.vmem [resolvable:$true] %s174
          %180 = dma.hbm_to_vmem [thread:$0]  %s173, 1024, %s175, [#allocation5], 128, 128, 8
        $region20: #{forward.1} parent=11 // pred_fallthru
          _
        // Predicated region
        $region21: #{forward.1} parent=11 // pred_check
          %p181 = pneg %p79
        $region22: #{forward.1} parent=11 // pred_check_branch
          %183 = sbr.rel (%p181) target = $region24
        $region23: #{forward.1} parent=11 // pred_region
          %185 = vsyncadd [#allocation10], 0
          %s186 = sshll.u32 %s2, 4
          %s187 = int_to_ptr.hbm [resolvable:$true] %s186
          %s188 = sshll.u32 [#allocation9], 4
          %s189 = int_to_ptr.vmem [resolvable:$true] %s188
          %194 = dma.hbm_to_vmem [thread:$0]  %s187, 2048, %s189, [#allocation10], 128, 128, 8
        $region24: #{forward.1} parent=11 // pred_fallthru
          _
        // Predicated region
        $region25: #{forward.1} parent=11 // pred_check
          %p195 = pneg %p100
        $region26: #{forward.1} parent=11 // pred_check_branch
          %197 = sbr.rel (%p195) target = $region28
        $region27: #{forward.1} parent=11 // pred_region
          %199 = vsyncadd [#allocation10], 0
          %s200 = sshll.u32 %s3, 4
          %s201 = int_to_ptr.hbm [resolvable:$true] %s200
          %s202 = sshll.u32 [#allocation11], 4
          %s203 = int_to_ptr.vmem [resolvable:$true] %s202
          %208 = dma.hbm_to_vmem [thread:$0]  %s201, 512, %s203, [#allocation10], 128, 128, 8
        $region28: #{forward.1} parent=11 // pred_fallthru
          _
      $region12: #{forward.1} parent=5 // pred_fallthru
        _
      %p209 = scmp.lt.s32.totalorder %s16, 10
      // Predicated region
      $region29: #{forward.1} parent=5 // pred_check
        %p210 = pneg %p209
      $region30: #{forward.1} parent=5 // pred_check_branch
        %212 = sbr.rel (%p210) target = $region32
      $region31: #{forward.1} parent=5 // pred_region
        _
      $region32: #{forward.1} parent=5 // pred_fallthru
        _
      %p213 = scmp.le.s32.totalorder 1, %s16
      %p214 = scmp.lt.s32.totalorder %s16, 11
      %p215 = pnand %p213, %p214
      %p216 = pneg %p215
      // Predicated region
      $region33: #{forward.1} parent=5 // pred_check
        _
      $region34: #{forward.1} parent=5 // pred_check_branch
        %218 = sbr.rel (%p215) target = $region36
      $region35: #{forward.1} parent=5 // pred_region
        %s219 = ssub.s32 %s16, 1
        // Predicated region
        $region37: #{forward.1} parent=35 // pred_check
          %p220 = pneg %p37
        $region38: #{forward.1} parent=35 // pred_check_branch
          %222 = sbr.rel (%p220) target = $region40
        $region39: #{forward.1} parent=35 // pred_region
          %224 = dma.done [#allocation7], 16
        $region40: #{forward.1} parent=35 // pred_fallthru
          _
        // Predicated region
        $region41: #{forward.1} parent=35 // pred_check
          %p225 = pneg %p58
        $region42: #{forward.1} parent=35 // pred_check_branch
          %227 = sbr.rel (%p225) target = $region44
        $region43: #{forward.1} parent=35 // pred_region
          %229 = dma.done [#allocation5], 1024
        $region44: #{forward.1} parent=35 // pred_fallthru
          _
        // Predicated region
        $region45: #{forward.1} parent=35 // pred_check
          %p230 = pneg %p79
        $region46: #{forward.1} parent=35 // pred_check_branch
          %232 = sbr.rel (%p230) target = $region48
        $region47: #{forward.1} parent=35 // pred_region
          %234 = dma.done [#allocation10], 2048
        $region48: #{forward.1} parent=35 // pred_fallthru
          _
        // Predicated region
        $region49: #{forward.1} parent=35 // pred_check
          %p235 = pneg %p100
        $region50: #{forward.1} parent=35 // pred_check_branch
          %237 = sbr.rel (%p235) target = $region52
        $region51: #{forward.1} parent=35 // pred_region
          %239 = dma.done [#allocation10], 512
        $region52: #{forward.1} parent=35 // pred_fallthru
          _
        %240 = sfence
        %p241 = pneg %p37
        %p242 = pneg %p34
        %p243 = pneg %p58
        %p244 = pneg %p55
        %p245 = pneg %p79
        %p246 = pneg %p76
        %p247 = pneg %p100
        %p248 = pneg %p97
        %p249 = pneg %p121
        %p250 = pneg %p118
        %p251 = pneg %p142
        %p252 = pneg %p139
        %p253 = scmp.eq.s32.totalorder %s21, 0
        // Predicated region
        $region53: #{forward.1} parent=35 // pred_check
          %p254 = pneg %p253
        $region54: #{forward.1} parent=35 // pred_check_branch
          %256 = sbr.rel (%p254) target = $region56
        $region55: #{forward.1} parent=35 // pred_region
          %257 = vst [vmem:[%s4] sm:$0xff] 1.0
          %258 = vst [vmem:[%s4 + $0x8] sm:$0xff] 1.0
          %259 = vst [vmem:[%s4 + $0x10] sm:$0xff] 1.0
          %260 = vst [vmem:[%s4 + $0x18] sm:$0xff] 1.0
          %261 = vst [vmem:[#allocation12] sm:$0xff] 1.0
          %262 = vst [vmem:[#allocation12 + $0x8] sm:$0xff] 1.0
          %263 = vst [vmem:[#allocation12 + $0x10] sm:$0xff] 1.0
          %264 = vst [vmem:[#allocation12 + $0x18] sm:$0xff] 1.0
          %265 = vst [vmem:[#allocation12 + $0x20] sm:$0xff] 1.0
          %266 = vst [vmem:[#allocation12 + $0x28] sm:$0xff] 1.0
          %267 = vst [vmem:[#allocation12 + $0x30] sm:$0xff] 1.0
          %268 = vst [vmem:[#allocation12 + $0x38] sm:$0xff] 1.0
          %s269 = scalar_lea.smem [#allocation3], 0
          %270 = sst [smem:[%s269]] 0
        $region56: #{forward.1} parent=35 // pred_fallthru
          _
        %s271 = sld [smem:[#allocation3]]
        %p272 = scmp.eq.s32.totalorder %s271, 0
        // Predicated region
        $region57: #{forward.1} parent=35 // pred_check
          %p273 = pneg %p272
        $region58: #{forward.1} parent=35 // pred_check_branch
          %275 = sbr.rel (%p273) target = $region60
        $region59: #{forward.1} parent=35 // pred_region
          %v276 = vld [vmem:[#allocation9] sm:$0xff]
          %v277 = vld [vmem:[#allocation9 + $0x8] sm:$0xff]
          %v278 = vld [vmem:[#allocation9 + $0x10] sm:$0xff]
          %v279 = vld [vmem:[#allocation9 + $0x18] sm:$0xff]
          %v280 = vld [vmem:[#allocation9 + $0x20] sm:$0xff]
          %v281 = vld [vmem:[#allocation9 + $0x28] sm:$0xff]
          %v282 = vld [vmem:[#allocation9 + $0x30] sm:$0xff]
          %v283 = vld [vmem:[#allocation9 + $0x38] sm:$0xff]
          %v284 = vld [vmem:[#allocation9 + $0x40] sm:$0xff]
          %v285 = vld [vmem:[#allocation9 + $0x48] sm:$0xff]
          %v286 = vld [vmem:[#allocation9 + $0x50] sm:$0xff]
          %v287 = vld [vmem:[#allocation9 + $0x58] sm:$0xff]
          %v288 = vld [vmem:[#allocation9 + $0x60] sm:$0xff]
          %v289 = vld [vmem:[#allocation9 + $0x68] sm:$0xff]
          %v290 = vld [vmem:[#allocation9 + $0x70] sm:$0xff]
          %v291 = vld [vmem:[#allocation9 + $0x78] sm:$0xff]
          %v292 = vld [vmem:[#allocation11] sm:$0xff]
          %v293 = vld [vmem:[#allocation11 + $0x8] sm:$0xff]
          %v294 = vld [vmem:[#allocation11 + $0x10] sm:$0xff]
          %v295 = vld [vmem:[#allocation11 + $0x18] sm:$0xff]
          %v296 = vld [vmem:[#allocation12] sm:$0xff]
          %v297 = vld [vmem:[#allocation12 + $0x8] sm:$0xff]
          %v298 = vld [vmem:[#allocation12 + $0x10] sm:$0xff]
          %v299 = vld [vmem:[#allocation12 + $0x18] sm:$0xff]
          %v300 = vld [vmem:[#allocation12 + $0x20] sm:$0xff]
          %v301 = vld [vmem:[#allocation12 + $0x28] sm:$0xff]
          %v302 = vld [vmem:[#allocation12 + $0x30] sm:$0xff]
          %v303 = vld [vmem:[#allocation12 + $0x38] sm:$0xff]
          %v304 = vld [vmem:[#allocation8] sm:$0xff]
          %v305 = vld [vmem:[#allocation8 + $0x8] sm:$0xff]
          %v306 = vld [vmem:[#allocation8 + $0x10] sm:$0xff]
          %v307 = vld [vmem:[#allocation8 + $0x18] sm:$0xff]
          %v308 = vld [vmem:[#allocation8 + $0x20] sm:$0xff]
          %v309 = vld [vmem:[#allocation8 + $0x28] sm:$0xff]
          %v310 = vld [vmem:[#allocation8 + $0x30] sm:$0xff]
          %v311 = vld [vmem:[#allocation8 + $0x38] sm:$0xff]
          %v312 = vld [vmem:[%s4] sm:$0xff]
          %v313 = vld [vmem:[%s4 + $0x8] sm:$0xff]
          %v314 = vld [vmem:[%s4 + $0x10] sm:$0xff]
          %v315 = vld [vmem:[%s4 + $0x18] sm:$0xff]
          %v316 = vmul.f32 %v296, 0.00024414063
          %v317 = vmul.f32 %v297, 0.00024414063
          %v318 = vmul.f32 %v298, 0.00024414063
          %v319 = vmul.f32 %v299, 0.00024414063
          %v320 = vmul.f32 %v300, 0.00024414063
          %v321 = vmul.f32 %v301, 0.00024414063
          %v322 = vmul.f32 %v302, 0.00024414063
          %v323 = vmul.f32 %v303, 0.00024414063
          %324 = vmatpush.msra.mxu0 %v291
          %325 = vmatpush.msra.mxu0 %v290
          %326 = vmatpush.msra.mxu0 %v289
          %327 = vmatpush.msra.mxu0 %v288
          %328 = vmatpush.msra.mxu0 %v287
          %329 = vmatpush.msra.mxu0 %v286
          %330 = vmatpush.msra.mxu0 %v285
          %331 = vmatpush.msra.mxu0 %v284
          %332 = vmatpush.msra.mxu0 %v283
          %333 = vmatpush.msra.mxu0 %v282
          %334 = vmatpush.msra.mxu0 %v281
          %335 = vmatpush.msra.mxu0 %v280
          %336 = vmatpush.msra.mxu0 %v279
          %337 = vmatpush.msra.mxu0 %v278
          %338 = vmatpush.msra.mxu0 %v277
          %339 = vmatpush.msra.mxu0 %v276
          %340 = vmatmul.f32.gmra.mxu0 %v316
          %v341 = vpop.f32.mrf.mxu0
          %v342 = vadd.f32 0.0, %v341
          %343 = vmatmul.f32.gmra.mxu0 %v317
          %v344 = vpop.f32.mrf.mxu0
          %v345 = vadd.f32 0.0, %v344
          %346 = vmatmul.f32.gmra.mxu0 %v318
          %v347 = vpop.f32.mrf.mxu0
          %v348 = vadd.f32 0.0, %v347
          %349 = vmatmul.f32.gmra.mxu0 %v319
          %v350 = vpop.f32.mrf.mxu0
          %v351 = vadd.f32 0.0, %v350
          %352 = vmatmul.f32.gmra.mxu0 %v320
          %v353 = vpop.f32.mrf.mxu0
          %v354 = vadd.f32 0.0, %v353
          %355 = vmatmul.f32.gmra.mxu0 %v321
          %v356 = vpop.f32.mrf.mxu0
          %v357 = vadd.f32 0.0, %v356
          %358 = vmatmul.f32.gmra.mxu0 %v322
          %v359 = vpop.f32.mrf.mxu0
          %v360 = vadd.f32 0.0, %v359
          %361 = vmatmul.f32.gmra.mxu0 %v323
          %v362 = vpop.f32.mrf.mxu0
          %v363 = vadd.f32 0.0, %v362
          %364 = vdwg.mxu0
          %vm365 = vcmask 261120
          %v367 = vsel %vm365, %v292, 0
          %v370 = vsel %vm365, %v293, 0
          %v373 = vsel %vm365, %v294, 0
          %v376 = vsel %vm365, %v295, 0
          %378 = vmatpush.msra.mxu0 0.0
          %379 = vmatpush.msra.mxu0 0.0
          %380 = vmatpush.msra.mxu0 0.0
          %381 = vmatpush.msra.mxu0 0.0
          %382 = vmatpush.msra.mxu0 0.0
          %383 = vmatpush.msra.mxu0 0.0
          %384 = vmatpush.msra.mxu0 0.0
          %385 = vmatpush.msra.mxu0 0.0
          %386 = vmatpush.msra.mxu0 0.0
          %387 = vmatpush.msra.mxu0 0.0
          %388 = vmatpush.msra.mxu0 0.0
          %389 = vmatpush.msra.mxu0 0.0
          %390 = vmatpush.msra.mxu0 %v351
          %391 = vmatpush.msra.mxu0 %v348
          %392 = vmatpush.msra.mxu0 %v345
          %393 = vmatpush.msra.mxu0 %v342
          %394 = vmatmul.f32.gmra.mxu0 %v367
          %v395 = vpop.f32.mrf.mxu0
          %v396 = vadd.f32 0.0, %v395
          %397 = vmatmul.f32.gmra.mxu0 %v370
          %v398 = vpop.f32.mrf.mxu0
          %v399 = vadd.f32 0.0, %v398
          %400 = vmatmul.f32.gmra.mxu0 %v373
          %v401 = vpop.f32.mrf.mxu0
          %v402 = vadd.f32 0.0, %v401
          %403 = vmatmul.f32.gmra.mxu0 %v376
          %v404 = vpop.f32.mrf.mxu0
          %v405 = vadd.f32 0.0, %v404
          %406 = vdwg.mxu0
          %407 = vst [vmem:[#allocation2] sm:$0xff] %v396
          %408 = vst [vmem:[#allocation2 + $0x8] sm:$0xff] %v399
          %409 = vst [vmem:[#allocation2 + $0x10] sm:$0xff] %v402
          %410 = vst [vmem:[#allocation2 + $0x18] sm:$0xff] %v405
          %411 = vmatpush.msra.mxu0 0.0
          %412 = vmatpush.msra.mxu0 0.0
          %413 = vmatpush.msra.mxu0 0.0
          %414 = vmatpush.msra.mxu0 0.0
          %415 = vmatpush.msra.mxu0 0.0
          %416 = vmatpush.msra.mxu0 0.0
          %417 = vmatpush.msra.mxu0 0.0
          %418 = vmatpush.msra.mxu0 0.0
          %419 = vmatpush.msra.mxu0 0.0
          %420 = vmatpush.msra.mxu0 0.0
          %421 = vmatpush.msra.mxu0 0.0
          %422 = vmatpush.msra.mxu0 0.0
          %423 = vmatpush.msra.mxu0 %v363
          %424 = vmatpush.msra.mxu0 %v360
          %425 = vmatpush.msra.mxu0 %v357
          %426 = vmatpush.msra.mxu0 %v354
          %427 = vmatmul.f32.gmra.mxu0 %v367
          %v428 = vpop.f32.mrf.mxu0
          %v429 = vadd.f32 0.0, %v428
          %430 = vmatmul.f32.gmra.mxu0 %v370
          %v431 = vpop.f32.mrf.mxu0
          %v432 = vadd.f32 0.0, %v431
          %433 = vmatmul.f32.gmra.mxu0 %v373
          %v434 = vpop.f32.mrf.mxu0
          %v435 = vadd.f32 0.0, %v434
          %436 = vmatmul.f32.gmra.mxu0 %v376
          %v437 = vpop.f32.mrf.mxu0
          %v438 = vadd.f32 0.0, %v437
          %439 = vdwg.mxu0
          %s440 = scalar_lea.vmem [#allocation2], 32
          %441 = vst [vmem:[%s440] sm:$0xff] %v429
          %442 = vst [vmem:[%s440 + $0x8] sm:$0xff] %v432
          %443 = vst [vmem:[%s440 + $0x10] sm:$0xff] %v435
          %444 = vst [vmem:[%s440 + $0x18] sm:$0xff] %v438
          %v445 = vld [vmem:[#allocation2] sm:$0xff]
          %v446 = vld [vmem:[#allocation2 + $0x8] sm:$0xff]
          %v447 = vld [vmem:[#allocation2 + $0x10] sm:$0xff]
          %v448 = vld [vmem:[#allocation2 + $0x18] sm:$0xff]
          %v449 = vld [vmem:[#allocation2 + $0x20] sm:$0xff]
          %v450 = vld [vmem:[#allocation2 + $0x28] sm:$0xff]
          %v451 = vld [vmem:[#allocation2 + $0x30] sm:$0xff]
          %v452 = vld [vmem:[#allocation2 + $0x38] sm:$0xff]
          %v453 = vadd.f32 %v445, 1e-07
          %v454 = vadd.f32 %v446, 1e-07
          %v455 = vadd.f32 %v447, 1e-07
          %v456 = vadd.f32 %v448, 1e-07
          %v457 = vadd.f32 %v449, 1e-07
          %v458 = vadd.f32 %v450, 1e-07
          %v459 = vadd.f32 %v451, 1e-07
          %v460 = vadd.f32 %v452, 1e-07
          %v461 = vrcp.pop %v453
          %v462 = vmul.f32 %v453, %v461
          %v463 = vsub.f32 1.0, %v462
          %v464 = vmul.f32 %v461, %v463
          %v465 = vadd.f32 %v461, %v464
          %vm466 = vweird.f32 %v453
          %vm467 = vweird.f32 %v461
          %vm468 = vmor %vm466, %vm467
          %v469 = vsel %vm468, %v461, %v465
          %v470 = vand.u32 2147483647, %v453
          %vm471 = vcmp.eq.f32.partialorder %v470, 8.507059e+37
          %v472 = vand.u32 %v453, 2147483648
          %v473 = vor.u32 1.1754944e-38, %v472
          %v474 = vsel %vm471, %v473, %v469
          %v475 = vrcp.pop %v454
          %v476 = vmul.f32 %v454, %v475
          %v477 = vsub.f32 1.0, %v476
          %v478 = vmul.f32 %v475, %v477
          %v479 = vadd.f32 %v475, %v478
          %vm480 = vweird.f32 %v454
          %vm481 = vweird.f32 %v475
          %vm482 = vmor %vm480, %vm481
          %v483 = vsel %vm482, %v475, %v479
          %v484 = vand.u32 2147483647, %v454
          %vm485 = vcmp.eq.f32.partialorder %v484, 8.507059e+37
          %v486 = vand.u32 %v454, 2147483648
          %v487 = vor.u32 1.1754944e-38, %v486
          %v488 = vsel %vm485, %v487, %v483
          %v489 = vrcp.pop %v455
          %v490 = vmul.f32 %v455, %v489
          %v491 = vsub.f32 1.0, %v490
          %v492 = vmul.f32 %v489, %v491
          %v493 = vadd.f32 %v489, %v492
          %vm494 = vweird.f32 %v455
          %vm495 = vweird.f32 %v489
          %vm496 = vmor %vm494, %vm495
          %v497 = vsel %vm496, %v489, %v493
          %v498 = vand.u32 2147483647, %v455
          %vm499 = vcmp.eq.f32.partialorder %v498, 8.507059e+37
          %v500 = vand.u32 %v455, 2147483648
          %v501 = vor.u32 1.1754944e-38, %v500
          %v502 = vsel %vm499, %v501, %v497
          %v503 = vrcp.pop %v456
          %v504 = vmul.f32 %v456, %v503
          %v505 = vsub.f32 1.0, %v504
          %v506 = vmul.f32 %v503, %v505
          %v507 = vadd.f32 %v503, %v506
          %vm508 = vweird.f32 %v456
          %vm509 = vweird.f32 %v503
          %vm510 = vmor %vm508, %vm509
          %v511 = vsel %vm510, %v503, %v507
          %v512 = vand.u32 2147483647, %v456
          %vm513 = vcmp.eq.f32.partialorder %v512, 8.507059e+37
          %v514 = vand.u32 %v456, 2147483648
          %v515 = vor.u32 1.1754944e-38, %v514
          %v516 = vsel %vm513, %v515, %v511
          %v517 = vrcp.pop %v457
          %v518 = vmul.f32 %v457, %v517
          %v519 = vsub.f32 1.0, %v518
          %v520 = vmul.f32 %v517, %v519
          %v521 = vadd.f32 %v517, %v520
          %vm522 = vweird.f32 %v457
          %vm523 = vweird.f32 %v517
          %vm524 = vmor %vm522, %vm523
          %v525 = vsel %vm524, %v517, %v521
          %v526 = vand.u32 2147483647, %v457
          %vm527 = vcmp.eq.f32.partialorder %v526, 8.507059e+37
          %v528 = vand.u32 %v457, 2147483648
          %v529 = vor.u32 1.1754944e-38, %v528
          %v530 = vsel %vm527, %v529, %v525
          %v531 = vrcp.pop %v458
          %v532 = vmul.f32 %v458, %v531
          %v533 = vsub.f32 1.0, %v532
          %v534 = vmul.f32 %v531, %v533
          %v535 = vadd.f32 %v531, %v534
          %vm536 = vweird.f32 %v458
          %vm537 = vweird.f32 %v531
          %vm538 = vmor %vm536, %vm537
          %v539 = vsel %vm538, %v531, %v535
          %v540 = vand.u32 2147483647, %v458
          %vm541 = vcmp.eq.f32.partialorder %v540, 8.507059e+37
          %v542 = vand.u32 %v458, 2147483648
          %v543 = vor.u32 1.1754944e-38, %v542
          %v544 = vsel %vm541, %v543, %v539
          %v545 = vrcp.pop %v459
          %v546 = vmul.f32 %v459, %v545
          %v547 = vsub.f32 1.0, %v546
          %v548 = vmul.f32 %v545, %v547
          %v549 = vadd.f32 %v545, %v548
          %vm550 = vweird.f32 %v459
          %vm551 = vweird.f32 %v545
          %vm552 = vmor %vm550, %vm551
          %v553 = vsel %vm552, %v545, %v549
          %v554 = vand.u32 2147483647, %v459
          %vm555 = vcmp.eq.f32.partialorder %v554, 8.507059e+37
          %v556 = vand.u32 %v459, 2147483648
          %v557 = vor.u32 1.1754944e-38, %v556
          %v558 = vsel %vm555, %v557, %v553
          %v559 = vrcp.pop %v460
          %v560 = vmul.f32 %v460, %v559
          %v561 = vsub.f32 1.0, %v560
          %v562 = vmul.f32 %v559, %v561
          %v563 = vadd.f32 %v559, %v562
          %vm564 = vweird.f32 %v460
          %vm565 = vweird.f32 %v559
          %vm566 = vmor %vm564, %vm565
          %v567 = vsel %vm566, %v559, %v563
          %v568 = vand.u32 2147483647, %v460
          %vm569 = vcmp.eq.f32.partialorder %v568, 8.507059e+37
          %v570 = vand.u32 %v460, 2147483648
          %v571 = vor.u32 1.1754944e-38, %v570
          %v572 = vsel %vm569, %v571, %v567
          %v573 = vmul.f32 %v304, %v474
          %v574 = vmul.f32 %v305, %v488
          %v575 = vmul.f32 %v306, %v502
          %v576 = vmul.f32 %v307, %v516
          %v577 = vmul.f32 %v308, %v530
          %v578 = vmul.f32 %v309, %v544
          %v579 = vmul.f32 %v310, %v558
          %v580 = vmul.f32 %v311, %v572
          %v581 = vmul.f32 %v573, 0.00024414063
          %v582 = vmul.f32 %v574, 0.00024414063
          %v583 = vmul.f32 %v575, 0.00024414063
          %v584 = vmul.f32 %v576, 0.00024414063
          %v585 = vmul.f32 %v577, 0.00024414063
          %v586 = vmul.f32 %v578, 0.00024414063
          %v587 = vmul.f32 %v579, 0.00024414063
          %v588 = vmul.f32 %v580, 0.00024414063
          %589 = vmatpush.msra.mxu0 %v291
          %590 = vmatpush.msra.mxu0 %v290
          %591 = vmatpush.msra.mxu0 %v289
          %592 = vmatpush.msra.mxu0 %v288
          %593 = vmatpush.msra.mxu0 %v287
          %594 = vmatpush.msra.mxu0 %v286
          %595 = vmatpush.msra.mxu0 %v285
          %596 = vmatpush.msra.mxu0 %v284
          %597 = vmatpush.msra.mxu0 %v283
          %598 = vmatpush.msra.mxu0 %v282
          %599 = vmatpush.msra.mxu0 %v281
          %600 = vmatpush.msra.mxu0 %v280
          %601 = vmatpush.msra.mxu0 %v279
          %602 = vmatpush.msra.mxu0 %v278
          %603 = vmatpush.msra.mxu0 %v277
          %604 = vmatpush.msra.mxu0 %v276
          %605 = vmatmul.f32.gmra.mxu0 %v581
          %v606 = vpop.f32.mrf.mxu0
          %v607 = vadd.f32 0.0, %v606
          %608 = vmatmul.f32.gmra.mxu0 %v582
          %v609 = vpop.f32.mrf.mxu0
          %v610 = vadd.f32 0.0, %v609
          %611 = vmatmul.f32.gmra.mxu0 %v583
          %v612 = vpop.f32.mrf.mxu0
          %v613 = vadd.f32 0.0, %v612
          %614 = vmatmul.f32.gmra.mxu0 %v584
          %v615 = vpop.f32.mrf.mxu0
          %v616 = vadd.f32 0.0, %v615
          %617 = vmatmul.f32.gmra.mxu0 %v585
          %v618 = vpop.f32.mrf.mxu0
          %v619 = vadd.f32 0.0, %v618
          %620 = vmatmul.f32.gmra.mxu0 %v586
          %v621 = vpop.f32.mrf.mxu0
          %v622 = vadd.f32 0.0, %v621
          %623 = vmatmul.f32.gmra.mxu0 %v587
          %v624 = vpop.f32.mrf.mxu0
          %v625 = vadd.f32 0.0, %v624
          %626 = vmatmul.f32.gmra.mxu0 %v588
          %v627 = vpop.f32.mrf.mxu0
          %v628 = vadd.f32 0.0, %v627
          %629 = vdwg.mxu0
          %630 = vmatpush.msra.mxu0 0.0
          %631 = vmatpush.msra.mxu0 0.0
          %632 = vmatpush.msra.mxu0 0.0
          %633 = vmatpush.msra.mxu0 0.0
          %634 = vmatpush.msra.mxu0 0.0
          %635 = vmatpush.msra.mxu0 0.0
          %636 = vmatpush.msra.mxu0 0.0
          %637 = vmatpush.msra.mxu0 0.0
          %638 = vmatpush.msra.mxu0 0.0
          %639 = vmatpush.msra.mxu0 0.0
          %640 = vmatpush.msra.mxu0 0.0
          %641 = vmatpush.msra.mxu0 0.0
          %642 = vmatpush.msra.mxu0 %v616
          %643 = vmatpush.msra.mxu0 %v613
          %644 = vmatpush.msra.mxu0 %v610
          %645 = vmatpush.msra.mxu0 %v607
          %646 = vmatmul.f32.gmra.mxu0 %v367
          %v647 = vpop.f32.mrf.mxu0
          %v648 = vadd.f32 0.0, %v647
          %649 = vmatmul.f32.gmra.mxu0 %v370
          %v650 = vpop.f32.mrf.mxu0
          %v651 = vadd.f32 0.0, %v650
          %652 = vmatmul.f32.gmra.mxu0 %v373
          %v653 = vpop.f32.mrf.mxu0
          %v654 = vadd.f32 0.0, %v653
          %655 = vmatmul.f32.gmra.mxu0 %v376
          %v656 = vpop.f32.mrf.mxu0
          %v657 = vadd.f32 0.0, %v656
          %658 = vdwg.mxu0
          %659 = vst [vmem:[#allocation2] sm:$0xff] %v648
          %660 = vst [vmem:[#allocation2 + $0x8] sm:$0xff] %v651
          %661 = vst [vmem:[#allocation2 + $0x10] sm:$0xff] %v654
          %662 = vst [vmem:[#allocation2 + $0x18] sm:$0xff] %v657
          %663 = vmatpush.msra.mxu0 0.0
          %664 = vmatpush.msra.mxu0 0.0
          %665 = vmatpush.msra.mxu0 0.0
          %666 = vmatpush.msra.mxu0 0.0
          %667 = vmatpush.msra.mxu0 0.0
          %668 = vmatpush.msra.mxu0 0.0
          %669 = vmatpush.msra.mxu0 0.0
          %670 = vmatpush.msra.mxu0 0.0
          %671 = vmatpush.msra.mxu0 0.0
          %672 = vmatpush.msra.mxu0 0.0
          %673 = vmatpush.msra.mxu0 0.0
          %674 = vmatpush.msra.mxu0 0.0
          %675 = vmatpush.msra.mxu0 %v628
          %676 = vmatpush.msra.mxu0 %v625
          %677 = vmatpush.msra.mxu0 %v622
          %678 = vmatpush.msra.mxu0 %v619
          %679 = vmatmul.f32.gmra.mxu0 %v367
          %v680 = vpop.f32.mrf.mxu0
          %v681 = vadd.f32 0.0, %v680
          %682 = vmatmul.f32.gmra.mxu0 %v370
          %v683 = vpop.f32.mrf.mxu0
          %v684 = vadd.f32 0.0, %v683
          %685 = vmatmul.f32.gmra.mxu0 %v373
          %v686 = vpop.f32.mrf.mxu0
          %v687 = vadd.f32 0.0, %v686
          %688 = vmatmul.f32.gmra.mxu0 %v376
          %v689 = vpop.f32.mrf.mxu0
          %v690 = vadd.f32 0.0, %v689
          %691 = vdwg.mxu0
          %692 = vst [vmem:[%s440] sm:$0xff] %v681
          %693 = vst [vmem:[%s440 + $0x8] sm:$0xff] %v684
          %694 = vst [vmem:[%s440 + $0x10] sm:$0xff] %v687
          %695 = vst [vmem:[%s440 + $0x18] sm:$0xff] %v690
          %v696 = vld [vmem:[#allocation2] sm:$0xff]
          %v697 = vld [vmem:[#allocation2 + $0x8] sm:$0xff]
          %v698 = vld [vmem:[#allocation2 + $0x10] sm:$0xff]
          %v699 = vld [vmem:[#allocation2 + $0x18] sm:$0xff]
          %v700 = vld [vmem:[#allocation2 + $0x20] sm:$0xff]
          %v701 = vld [vmem:[#allocation2 + $0x28] sm:$0xff]
          %v702 = vld [vmem:[#allocation2 + $0x30] sm:$0xff]
          %v703 = vld [vmem:[#allocation2 + $0x38] sm:$0xff]
          %v704 = vmul.f32 %v296, %v696
          %v705 = vmul.f32 %v297, %v697
          %v706 = vmul.f32 %v298, %v698
          %v707 = vmul.f32 %v299, %v699
          %v708 = vmul.f32 %v300, %v700
          %v709 = vmul.f32 %v301, %v701
          %v710 = vmul.f32 %v302, %v702
          %v711 = vmul.f32 %v303, %v703
          %v712 = vadd.f32 %v704, 1e-07
          %v713 = vadd.f32 %v705, 1e-07
          %v714 = vadd.f32 %v706, 1e-07
          %v715 = vadd.f32 %v707, 1e-07
          %v716 = vadd.f32 %v708, 1e-07
          %v717 = vadd.f32 %v709, 1e-07
          %v718 = vadd.f32 %v710, 1e-07
          %v719 = vadd.f32 %v711, 1e-07
          %v720 = vlog2.pop %v712
          %v721 = vmul.f32 %v720, 0.6931472
          %v722 = vlog2.pop %v713
          %v723 = vmul.f32 %v722, 0.6931472
          %v724 = vlog2.pop %v714
          %v725 = vmul.f32 %v724, 0.6931472
          %v726 = vlog2.pop %v715
          %v727 = vmul.f32 %v726, 0.6931472
          %v728 = vlog2.pop %v716
          %v729 = vmul.f32 %v728, 0.6931472
          %v730 = vlog2.pop %v717
          %v731 = vmul.f32 %v730, 0.6931472
          %v732 = vlog2.pop %v718
          %v733 = vmul.f32 %v732, 0.6931472
          %v734 = vlog2.pop %v719
          %v735 = vmul.f32 %v734, 0.6931472
          %s736 = sld [smem:[#allocation4]]
          %v737 = vstv %s736
          %v738 = vmul.f32 %v737, %v721
          %v739 = vmul.f32 %v737, %v723
          %v740 = vmul.f32 %v737, %v725
          %v741 = vmul.f32 %v737, %v727
          %s742 = sld [smem:[#allocation4 + $0x1]]
          %v743 = vstv %s742
          %v744 = vmul.f32 %v743, %v729
          %v745 = vmul.f32 %v743, %v731
          %v746 = vmul.f32 %v743, %v733
          %v747 = vmul.f32 %v743, %v735
          %v748 = vadd.f32 %v738, %v744
          %v749 = vadd.f32 %v739, %v745
          %v750 = vadd.f32 %v740, %v746
          %v751 = vadd.f32 %v741, %v747
          %v752 = vmul.f32 %v748, 1.442695
          %v753 = vpow.pop %v752
          %v754 = vmul.f32 %v749, 1.442695
          %v755 = vpow.pop %v754
          %v756 = vmul.f32 %v750, 1.442695
          %v757 = vpow.pop %v756
          %v758 = vmul.f32 %v751, 1.442695
          %v759 = vpow.pop %v758
          %vm760 = vcmp.eq.f32.partialorder %v753, %v753
          %vm761 = vcmp.eq.f32.partialorder %v755, %v755
          %vm762 = vcmp.eq.f32.partialorder %v757, %v757
          %vm763 = vcmp.eq.f32.partialorder %v759, %v759
          %v764 = vand.u32 2147483647, %v753
          %v765 = vand.u32 2147483647, %v755
          %v766 = vand.u32 2147483647, %v757
          %v767 = vand.u32 2147483647, %v759
          %vm768 = vcmp.le.f32.partialorder %v764, 3.4028235e+38
          %vm769 = vcmp.le.f32.partialorder %v765, 3.4028235e+38
          %vm770 = vcmp.le.f32.partialorder %v766, 3.4028235e+38
          %vm771 = vcmp.le.f32.partialorder %v767, 3.4028235e+38
          %vm772 = vmand %vm760, %vm768
          %vm773 = vmand %vm761, %vm769
          %vm774 = vmand %vm762, %vm770
          %vm775 = vmand %vm763, %vm771
          %v776 = vsel %vm772, 1, 0
          %v777 = vsel %vm773, 1, 0
          %v778 = vsel %vm774, 1, 0
          %v779 = vsel %vm775, 1, 0
          %v780 = vcvt.s32.f32 %v776
          %v781 = vcvt.s32.f32 %v777
          %v782 = vcvt.s32.f32 %v778
          %v783 = vcvt.s32.f32 %v779
          %v784 = vmin.f32 %v780, %v781
          %v785 = vmin.f32 %v782, %v783
          %v786 = vmin.f32 %v784, %v785
          %787 = vmin.xlane.f32.xlu0 %v786
          %v788 = vpop.xlane.xlu0 %787
          %v789 = vrot.slane %v788, 4
          %v790 = vmin.f32 %v788, %v789
          %v791 = vrot.slane %v790, 2
          %v792 = vmin.f32 %v790, %v791
          %v793 = vrot.slane %v792, 1
          %v794 = vmin.f32 %v792, %v793
          %s795 = vtos %v794
          %p796 = scmp.gt.f32.partialorder %s795, 0.5
          // Predicated region
          $region61: #{forward.1} parent=59 // pred_check
            %p797 = pneg %p796
          $region62: #{forward.1} parent=59 // pred_check_branch
            %799 = sbr.rel (%p797) target = $region64
          $region63: #{forward.1} parent=59 // pred_region
            %v800 = vmul.f32 %v296, %v753
            %v801 = vmul.f32 %v297, %v755
            %v802 = vmul.f32 %v298, %v757
            %v803 = vmul.f32 %v299, %v759
            %v804 = vmul.f32 %v300, %v753
            %v805 = vmul.f32 %v301, %v755
            %v806 = vmul.f32 %v302, %v757
            %v807 = vmul.f32 %v303, %v759
            %v808 = vrcp.pop %v712
            %v809 = vmul.f32 %v712, %v808
            %v810 = vsub.f32 1.0, %v809
            %v811 = vmul.f32 %v808, %v810
            %v812 = vadd.f32 %v808, %v811
            %vm813 = vweird.f32 %v712
            %vm814 = vweird.f32 %v808
            %vm815 = vmor %vm813, %vm814
            %v816 = vsel %vm815, %v808, %v812
            %v817 = vand.u32 2147483647, %v712
            %vm818 = vcmp.eq.f32.partialorder %v817, 8.507059e+37
            %v819 = vand.u32 %v712, 2147483648
            %v820 = vor.u32 1.1754944e-38, %v819
            %v821 = vsel %vm818, %v820, %v816
            %v822 = vrcp.pop %v713
            %v823 = vmul.f32 %v713, %v822
            %v824 = vsub.f32 1.0, %v823
            %v825 = vmul.f32 %v822, %v824
            %v826 = vadd.f32 %v822, %v825
            %vm827 = vweird.f32 %v713
            %vm828 = vweird.f32 %v822
            %vm829 = vmor %vm827, %vm828
            %v830 = vsel %vm829, %v822, %v826
            %v831 = vand.u32 2147483647, %v713
            %vm832 = vcmp.eq.f32.partialorder %v831, 8.507059e+37
            %v833 = vand.u32 %v713, 2147483648
            %v834 = vor.u32 1.1754944e-38, %v833
            %v835 = vsel %vm832, %v834, %v830
            %v836 = vrcp.pop %v714
            %v837 = vmul.f32 %v714, %v836
            %v838 = vsub.f32 1.0, %v837
            %v839 = vmul.f32 %v836, %v838
            %v840 = vadd.f32 %v836, %v839
            %vm841 = vweird.f32 %v714
            %vm842 = vweird.f32 %v836
            %vm843 = vmor %vm841, %vm842
            %v844 = vsel %vm843, %v836, %v840
            %v845 = vand.u32 2147483647, %v714
            %vm846 = vcmp.eq.f32.partialorder %v845, 8.507059e+37
            %v847 = vand.u32 %v714, 2147483648
            %v848 = vor.u32 1.1754944e-38, %v847
            %v849 = vsel %vm846, %v848, %v844
            %v850 = vrcp.pop %v715
            %v851 = vmul.f32 %v715, %v850
            %v852 = vsub.f32 1.0, %v851
            %v853 = vmul.f32 %v850, %v852
            %v854 = vadd.f32 %v850, %v853
            %vm855 = vweird.f32 %v715
            %vm856 = vweird.f32 %v850
            %vm857 = vmor %vm855, %vm856
            %v858 = vsel %vm857, %v850, %v854
            %v859 = vand.u32 2147483647, %v715
            %vm860 = vcmp.eq.f32.partialorder %v859, 8.507059e+37
            %v861 = vand.u32 %v715, 2147483648
            %v862 = vor.u32 1.1754944e-38, %v861
            %v863 = vsel %vm860, %v862, %v858
            %v864 = vrcp.pop %v716
            %v865 = vmul.f32 %v716, %v864
            %v866 = vsub.f32 1.0, %v865
            %v867 = vmul.f32 %v864, %v866
            %v868 = vadd.f32 %v864, %v867
            %vm869 = vweird.f32 %v716
            %vm870 = vweird.f32 %v864
            %vm871 = vmor %vm869, %vm870
            %v872 = vsel %vm871, %v864, %v868
            %v873 = vand.u32 2147483647, %v716
            %vm874 = vcmp.eq.f32.partialorder %v873, 8.507059e+37
            %v875 = vand.u32 %v716, 2147483648
            %v876 = vor.u32 1.1754944e-38, %v875
            %v877 = vsel %vm874, %v876, %v872
            %v878 = vrcp.pop %v717
            %v879 = vmul.f32 %v717, %v878
            %v880 = vsub.f32 1.0, %v879
            %v881 = vmul.f32 %v878, %v880
            %v882 = vadd.f32 %v878, %v881
            %vm883 = vweird.f32 %v717
            %vm884 = vweird.f32 %v878
            %vm885 = vmor %vm883, %vm884
            %v886 = vsel %vm885, %v878, %v882
            %v887 = vand.u32 2147483647, %v717
            %vm888 = vcmp.eq.f32.partialorder %v887, 8.507059e+37
            %v889 = vand.u32 %v717, 2147483648
            %v890 = vor.u32 1.1754944e-38, %v889
            %v891 = vsel %vm888, %v890, %v886
            %v892 = vrcp.pop %v718
            %v893 = vmul.f32 %v718, %v892
            %v894 = vsub.f32 1.0, %v893
            %v895 = vmul.f32 %v892, %v894
            %v896 = vadd.f32 %v892, %v895
            %vm897 = vweird.f32 %v718
            %vm898 = vweird.f32 %v892
            %vm899 = vmor %vm897, %vm898
            %v900 = vsel %vm899, %v892, %v896
            %v901 = vand.u32 2147483647, %v718
            %vm902 = vcmp.eq.f32.partialorder %v901, 8.507059e+37
            %v903 = vand.u32 %v718, 2147483648
            %v904 = vor.u32 1.1754944e-38, %v903
            %v905 = vsel %vm902, %v904, %v900
            %v906 = vrcp.pop %v719
            %v907 = vmul.f32 %v719, %v906
            %v908 = vsub.f32 1.0, %v907
            %v909 = vmul.f32 %v906, %v908
            %v910 = vadd.f32 %v906, %v909
            %vm911 = vweird.f32 %v719
            %vm912 = vweird.f32 %v906
            %vm913 = vmor %vm911, %vm912
            %v914 = vsel %vm913, %v906, %v910
            %v915 = vand.u32 2147483647, %v719
            %vm916 = vcmp.eq.f32.partialorder %v915, 8.507059e+37
            %v917 = vand.u32 %v719, 2147483648
            %v918 = vor.u32 1.1754944e-38, %v917
            %v919 = vsel %vm916, %v918, %v914
            %v920 = vmul.f32 %v800, %v821
            %v921 = vmul.f32 %v801, %v835
            %v922 = vmul.f32 %v802, %v849
            %v923 = vmul.f32 %v803, %v863
            %v924 = vmul.f32 %v804, %v877
            %v925 = vmul.f32 %v805, %v891
            %v926 = vmul.f32 %v806, %v905
            %v927 = vmul.f32 %v807, %v919
            %v928 = vsub.f32 %v312, %v753
            %v929 = vsub.f32 %v313, %v755
            %v930 = vsub.f32 %v314, %v757
            %v931 = vsub.f32 %v315, %v759
            %v932 = vand.u32 2147483647, %v928
            %v933 = vand.u32 2147483647, %v929
            %v934 = vand.u32 2147483647, %v930
            %v935 = vand.u32 2147483647, %v931
            %v936 = vadd.f32 %v932, %v933
            %v937 = vadd.f32 %v936, %v934
            %v938 = vadd.f32 %v937, %v935
            %939 = vadd.xlane.f32.xlu0 %v938
            %v940 = vpop.xlane.xlu0 %939
            %v941 = vrot.slane %v940, 4
            %v942 = vadd.f32 %v940, %v941
            %v943 = vrot.slane %v942, 2
            %v944 = vadd.f32 %v942, %v943
            %v945 = vrot.slane %v944, 1
            %v946 = vadd.f32 %v944, %v945
            %s947 = vtos %v946
            %s948 = smul.f32 %s947, 0.00024414063
            %949 = vst [vmem:[%s4] sm:$0xff] %v753
            %950 = vst [vmem:[%s4 + $0x8] sm:$0xff] %v755
            %951 = vst [vmem:[%s4 + $0x10] sm:$0xff] %v757
            %952 = vst [vmem:[%s4 + $0x18] sm:$0xff] %v759
            %953 = vst [vmem:[#allocation12] sm:$0xff] %v920
            %954 = vst [vmem:[#allocation12 + $0x8] sm:$0xff] %v921
            %955 = vst [vmem:[#allocation12 + $0x10] sm:$0xff] %v922
            %956 = vst [vmem:[#allocation12 + $0x18] sm:$0xff] %v923
            %957 = vst [vmem:[#allocation12 + $0x20] sm:$0xff] %v924
            %958 = vst [vmem:[#allocation12 + $0x28] sm:$0xff] %v925
            %959 = vst [vmem:[#allocation12 + $0x30] sm:$0xff] %v926
            %960 = vst [vmem:[#allocation12 + $0x38] sm:$0xff] %v927
            %p961 = scmp.gt.s32.totalorder %s21, 0
            %p962 = scmp.lt.f32.partialorder %s948, 1e-07
            %p963 = pnand %p961, %p962
            %p964 = pneg %p963
            %s965 = scalar_select %p964, 1, 0
            %s966 = scalar_lea.smem [#allocation3], 0
            %967 = sst [smem:[%s966]] %s965
          $region64: #{forward.1} parent=59 // pred_fallthru
            _
          %p968 = pneg %p796
          // Predicated region
          $region65: #{forward.1} parent=59 // pred_check
            _
          $region66: #{forward.1} parent=59 // pred_check_branch
            %970 = sbr.rel (%p796) target = $region68
          $region67: #{forward.1} parent=59 // pred_region
            %s971 = scalar_lea.smem [#allocation3], 0
            %972 = sst [smem:[%s971]] 1
          $region68: #{forward.1} parent=59 // pred_fallthru
            _
        $region60: #{forward.1} parent=35 // pred_fallthru
          _
        // Predicated region
        $region69: #{forward.1} parent=35 // pred_check
          %p973 = pneg %p118
        $region70: #{forward.1} parent=35 // pred_check_branch
          %975 = sbr.rel (%p973) target = $region72
        $region71: #{forward.1} parent=35 // pred_region
          _
        $region72: #{forward.1} parent=35 // pred_fallthru
          _
        // Predicated region
        $region73: #{forward.1} parent=35 // pred_check
          %p976 = pneg %p139
        $region74: #{forward.1} parent=35 // pred_check_branch
          %978 = sbr.rel (%p976) target = $region76
        $region75: #{forward.1} parent=35 // pred_region
          %980 = vsyncadd [#allocation6], 0
          %s981 = sshll.u32 [#allocation12], 4
          %s982 = int_to_ptr.vmem [resolvable:$true] %s981
          %s983 = sshll.u32 %s5, 4
          %s984 = int_to_ptr.hbm [resolvable:$true] %s983
          %989 = dma.vmem_to_hbm [thread:$0]  %s982, 1024, %s984, [#allocation6], 128, 128, 8
        $region76: #{forward.1} parent=35 // pred_fallthru
          _
        // Predicated region
        $region77: #{forward.1} parent=35 // pred_check
          %p990 = pneg %p118
        $region78: #{forward.1} parent=35 // pred_check_branch
          %992 = sbr.rel (%p990) target = $region80
        $region79: #{forward.1} parent=35 // pred_region
          _
        $region80: #{forward.1} parent=35 // pred_fallthru
          _
        // Predicated region
        $region81: #{forward.1} parent=35 // pred_check
          %p993 = pneg %p139
        $region82: #{forward.1} parent=35 // pred_check_branch
          %995 = sbr.rel (%p993) target = $region84
        $region83: #{forward.1} parent=35 // pred_region
          %997 = dma.done [#allocation6], 1024
        $region84: #{forward.1} parent=35 // pred_fallthru
          _
      $region36: #{forward.1} parent=5 // pred_fallthru
        _
      %p998 = scmp.le.s32.totalorder 2, %s16
      // Predicated region
      $region85: #{forward.1} parent=5 // pred_check
        %p999 = pneg %p998
      $region86: #{forward.1} parent=5 // pred_check_branch
        %1001 = sbr.rel (%p999) target = $region88
      $region87: #{forward.1} parent=5 // pred_region
        %s1002 = ssub.s32 %s16, 2
      $region88: #{forward.1} parent=5 // pred_fallthru
        _
    $region6: #{forward.1} parent=1 // loop_footer
      %s20 = sadd.s32 1, %s16
    $region7: #{forward.1} parent=1 // loop_footer_branch
      %15 = sbr.rel target = $region3
    $region8: #{forward.1} parent=1 // loop_exit
      _
    %1003 = vsyncpa [#allocation5], 1
    %s1004 = scalar_lea.sflag [#allocation5], 1
    %1005 = vsyncpa %s1004, 1
    %1006 = vsyncpa [#allocation10], 1
    %1007 = vsyncpa [#allocation6], 1
    %s1008 = scalar_lea.sflag [#allocation6], 1
    %1009 = vsyncpa %s1008, 1
    %1010 = vsyncpa [#allocation7], 1
    %s1011 = scalar_lea.sflag [#allocation7], 1
    %1012 = vsyncpa %s1011, 1

</llo_original>
